<compile_context>
chip_gen: v6e
topology: v6e:2x2x1
jax: 0.10.0
libtpu: 0.0.40
codegen_flags: <defaults>
</compile_context>

<pallas_src>
import functools

import jax
import jax.numpy as jnp
from jax.experimental import pallas as pl
from jax.experimental.pallas import tpu as pltpu


# Per-block byte budget; pipeline double-buffers input and output so peak VMEM
# is ~4x this (= 8 MiB), inside every generation's scoped-VMEM default.
_TILE_BYTES = 2 * 1024 * 1024

# Below this many elements, launch overhead dominates a memory-bound scale;
# let XLA fuse a plain jnp multiply instead.
_MIN_PALLAS_ELEMS = 1024

# Lane-dense widths (multiples of 128) tried when flattening, widest first.
_LANE_WIDTHS = (4096, 2048, 1024, 512, 256, 128)


# --------------------------------------------------------------------------
# Kernel: o = g * scale  (scale = -lambda, a (1,) f32 scalar in SMEM)
# --------------------------------------------------------------------------
def _neg_scale_kernel(scale_ref, g_ref, o_ref):
    o_ref[...] = g_ref[...] * scale_ref[0].astype(g_ref.dtype)


# --------------------------------------------------------------------------
# Shape / tiling helpers
# --------------------------------------------------------------------------
def _as_2d(g):
    """Contiguous reshape to a lane-dense 2-D slab where possible."""
    if g.ndim == 2 and g.shape[-1] % 128 == 0:
        return g
    total = g.size
    if total % 128 == 0:
        for w in _LANE_WIDTHS:
            if total % w == 0:
                return g.reshape(total // w, w)
    # Awkward sizes: keep the trailing dim (full-width blocks are exempt from
    # the 128-lane rule; stores may be masked but results stay correct).
    if g.ndim >= 2:
        return g.reshape(-1, g.shape[-1])
    return g.reshape(1, total)


def _sublane_quantum(itemsize):
    return {1: 32, 2: 16, 4: 8}.get(int(itemsize), 8)


def _row_tile(rows, cols, itemsize):
    q = _sublane_quantum(itemsize)
    if rows <= q:
        return rows                                   # single full-extent block
    row_bytes = max(1, cols * itemsize)
    tb = max(q, (_TILE_BYTES // row_bytes) // q * q)   # VMEM byte budget
    half = ((-(-rows // 2)) + q - 1) // q * q          # >= 2 grid steps (v7x 2 TCs)
    return min(tb, half)


# --------------------------------------------------------------------------
# Backward: -lambda * g through a Pallas kernel
# --------------------------------------------------------------------------
def _neg_scale_pallas(g, neg_lambda):
    g2 = _as_2d(g)
    rows, cols = g2.shape
    itemsize = g2.dtype.itemsize
    tb = _row_tile(rows, cols, itemsize)
    grid = (pl.cdiv(rows, tb),)
    block = pl.BlockSpec((tb, cols), lambda i: (i, 0))
    scale = jnp.full((1,), neg_lambda, dtype=jnp.float32)

    out = pl.pallas_call(
        _neg_scale_kernel,
        out_shape=jax.ShapeDtypeStruct((rows, cols), g2.dtype),
        grid=grid,
        in_specs=[pl.BlockSpec(memory_space=pltpu.MemorySpace.SMEM), block],
        out_specs=block,
        input_output_aliases={1: 0},   # output reuses the cotangent's buffer
        compiler_params=pltpu.CompilerParams(
            dimension_semantics=("parallel",)),
        cost_estimate=pl.CostEstimate(
            flops=g.size, transcendentals=0,
            bytes_accessed=2 * g.size * itemsize),
    )(scale, g2)
    return out.reshape(g.shape)


def _neg_scale(g, lambda_):
    neg_lam = -float(lambda_)
    if g.size < _MIN_PALLAS_ELEMS:
        return jnp.asarray(neg_lam, dtype=g.dtype) * g
    return _neg_scale_pallas(g, neg_lam)


# --------------------------------------------------------------------------
# Gradient reversal op with custom VJP (mirrors GradientReversalFunction)
# --------------------------------------------------------------------------
@functools.partial(jax.custom_vjp, nondiff_argnums=(1,))
def gradient_reversal(x, lambda_=1.0):
    # Forward is the identity. JAX arrays are immutable, so PyTorch's
    # x.clone() has no observable analogue; no copy kernel / HBM traffic.
    return x


def _grl_fwd(x, lambda_):
    return x, None


def _grl_bwd(lambda_, _residuals, g):
    return (_neg_scale(g, lambda_),)


gradient_reversal.defvjp(_grl_fwd, _grl_bwd)


class GradientReversalLayer:
    """JAX/Pallas port of the PyTorch GradientReversalLayer module."""

    def __init__(self, lambda_=1.0):
        self.lambda_ = float(lambda_)

    def __call__(self, x):
        return gradient_reversal(x, self.lambda_)


# --------------------------------------------------------------------------
# Self-test
# --------------------------------------------------------------------------
if __name__ == "__main__":
    key = jax.random.PRNGKey(0)
    lam = 0.7
    layer = GradientReversalLayer(lambda_=lam)

    # --- f32 2-D case (lane-dense last dim, multi-step grid) --------------
    k0, k1 = jax.random.split(key)
    x = jax.random.normal(k0, (16, 256), jnp.float32)
    w = jax.random.normal(k1, (16, 256), jnp.float32)

    y = jax.block_until_ready(layer(x))
    assert y.shape == x.shape and jnp.array_equal(y, x), "forward must be identity"

    g = jax.block_until_ready(
        jax.grad(lambda xx: jnp.sum(gradient_reversal(xx, lam) * w))(x))
    assert jnp.allclose(g, -lam * w, atol=1e-6, rtol=1e-6), "bwd f32 mismatch"

    # --- bf16 case (16-row sublane quantum, partial last block) -----------
    k2, k3 = jax.random.split(k1)
    xb = jax.random.normal(k2, (24, 384), jnp.float32).astype(jnp.bfloat16)
    wb = jax.random.normal(k3, (24, 384), jnp.float32).astype(jnp.bfloat16)
    gb = jax.block_until_ready(
        jax.grad(lambda xx: jnp.sum(
            (gradient_reversal(xx, lam) * wb).astype(jnp.float32)))(xb))
    ref_b = (wb.astype(jnp.float32) * jnp.float32(-lam))
    assert jnp.allclose(gb.astype(jnp.float32), ref_b, atol=1e-2, rtol=1e-2), \
        "bwd bf16 mismatch"

    # --- N-D case exercising the flatten-to-lane-dense path ---------------
    k4, k5 = jax.random.split(k3)
    x4 = jax.random.normal(k4, (2, 4, 16, 16), jnp.float32)
    w4 = jax.random.normal(k5, (2, 4, 16, 16), jnp.float32)
    g4 = jax.block_until_ready(
        jax.grad(lambda xx: jnp.sum(gradient_reversal(xx, lam) * w4))(x4))
    assert g4.shape == x4.shape
    assert jnp.allclose(g4, -lam * w4, atol=1e-6, rtol=1e-6), "bwd 4-D mismatch"

    # --- tiny input takes the fused jnp fast path --------------------------
    xs = jax.random.normal(k0, (4, 8), jnp.float32)
    gs = jax.block_until_ready(
        jax.grad(lambda xx: jnp.sum(gradient_reversal(xx, lam) * xs))(xs))
    assert jnp.allclose(gs, -lam * xs, atol=1e-6, rtol=1e-6), "bwd tiny mismatch"

    print("KERNEL_OK")
</pallas_src>

<mosaic_0001>
module attributes {stable_mosaic.version = 11 : i64} {
  func.func @_neg_scale_kernel(%arg0: i32, %arg1: memref<1xf32, #tpu.memory_space<smem>>, %arg2: memref<8x256xf32, #tpu.memory_space<vmem>>, %arg3: memref<8x256xf32, #tpu.memory_space<vmem>>) attributes {dimension_semantics = [#tpu.dimension_semantics<parallel>], iteration_bounds = array<i64: 2>, scalar_prefetch = 0 : i64, scratch_operands = 0 : i64, tpu.core_type = #tpu.core_type<tc>, window_params = [{transform_indices = @transform_0, window_bounds = array<i64: 1>}, {transform_indices = @transform_1, window_bounds = array<i64: 8, 256>}, {transform_indices = @transform_2, window_bounds = array<i64: 8, 256>}]} {
    %c0 = arith.constant 0 : index
    %c0_0 = arith.constant 0 : index
    %0 = vector.load %arg2[%c0, %c0_0] : memref<8x256xf32, #tpu.memory_space<vmem>>, vector<8x256xf32>
    %c0_1 = arith.constant 0 : index
    %1 = memref.load %arg1[%c0_1] : memref<1xf32, #tpu.memory_space<smem>>
    %2 = vector.broadcast %1 : f32 to vector<8x256xf32>
    %3 = arith.mulf %0, %2 : vector<8x256xf32>
    %c0_2 = arith.constant 0 : index
    %c0_3 = arith.constant 0 : index
    %4 = vector.load %arg3[%c0_2, %c0_3] : memref<8x256xf32, #tpu.memory_space<vmem>>, vector<8x256xf32>
    tpu.vector_store %arg3[%c0_2, %c0_3], %3 {strides = array<i32>} : memref<8x256xf32, #tpu.memory_space<vmem>>, vector<8x256xf32>,
    return
  }
  func.func @transform_0(%arg0: i32) -> i32 {
    %c0_i32 = arith.constant 0 : i32
    %c0_i32_0 = arith.constant 0 : i32
    return %c0_i32 : i32
  }
  func.func @transform_1(%arg0: i32) -> (i32, i32) {
    %c0_i32 = arith.constant 0 : i32
    %c0_i32_0 = arith.constant 0 : i32
    return %arg0, %c0_i32 : i32, i32
  }
  func.func @transform_2(%arg0: i32) -> (i32, i32) {
    %c0_i32 = arith.constant 0 : i32
    %c0_i32_0 = arith.constant 0 : i32
    return %arg0, %c0_i32 : i32, i32
  }
}

</mosaic_0001>

<llo_original>
// kernel: tpu_custom_call.1
$region0: #{tpu_custom_call.1}
  #allocation0 [shape = 'u32[]', space=smem, size = 0x4, offset = 0x4, fixed_abs, tag = 'smem constant byte address 0x4 - core index']
  #allocation1 [shape = 'u32[144,128]{1,0:T(1,128)}', space=vmem, size = 0x12000, scoped, tag = 'internal scratch']
  #allocation2 [shape = 'f32[1]{0:T(128)S(6)}', space=smem, size = 0x200, scoped, tag = 'scoped memory for tpu_custom_call.1']
  %s0 = inlined_call_operand.<no memory space> [shape: f32[1], index: 0, kind: input, shape index: {}]
  %s1 = inlined_call_operand.hbm [shape: f32[16,256], index: 1, kind: input, shape index: {}, may-alias: {1,2}]
  %s2 = inlined_call_operand.hbm [shape: f32[16,256], index: 2, kind: output, shape index: {}, may-alias: {1,2}]
  %s3 = sld [smem:[#allocation0]]
  $region45: #{tpu_custom_call.1} parent=0
    _
  %s5 = ssub.s32 1, %s3
  %s6 = scalar_select 0, %s5, %s3
  %7 = sst [smem:[#allocation2]] %s0
  $region1: #{tpu_custom_call.1} parent=0
    #allocation3 [shape = 'u8[16384]{0}', space=vmem, size = 0x4000, scoped, tag = 'input window, operand 1']
    #allocation4 [shape = 's32[2]{0}', space=sflag, size = 0x8, scoped, tag = 'scoped memory for tpu_custom_call.1']
    #allocation5 [shape = 's32[2]{0}', space=sflag, size = 0x8, scoped, tag = 'scoped memory for tpu_custom_call.1']
    #allocation6 [shape = 'u8[16384]{0}', space=vmem, size = 0x4000, scoped, tag = 'output window, operand 0']
    %8 = vsyncpa [#allocation4], 0
    %s9 = scalar_lea.sflag [#allocation4], 1
    %10 = vsyncpa %s9, 0
    %11 = vsyncpa [#allocation5], 0
    %s12 = scalar_lea.sflag [#allocation5], 1
    %13 = vsyncpa %s12, 0
    loop: start=0, step=1, limit=4
    $region2: #{tpu_custom_call.1} parent=1 // loop_pre_header
      _
    $region3: #{tpu_custom_call.1} parent=1 // loop_header
      %s15 = sphi 0, %s19
      %p16 = scmp.ge.s32.totalorder %s15, 4
      %s23 = sphi 0, %s23
      %s25 = sphi 0, %s23
      %s26 = sphi 0, %s25
      %s40 = sphi 0, %s26
      %s46 = sphi 0, %s48
      %s49 = sphi 0, %s46
      %s50 = sphi 0, %s49
      %s66 = sphi 0, %s50
      %s72 = sphi 0, %s74
      %s75 = sphi 0, %s72
      %s76 = sphi 0, %s75
      %s92 = sphi 0, %s76
    $region4: #{tpu_custom_call.1} parent=1 // loop_header_branch
      %18 = sbr.rel (%p16) target = $region8
    $region5: #{tpu_custom_call.1} parent=1 // loop_body
      %s20 = ssub.s32 %s15, 1
      %s21 = ssub.s32 %s15, 2
      %s22 = sadd.s32 %s15, 1
      %s24 = sadd.s32 %s23, 1
      %p27 = scmp.eq.s32.totalorder %s15, 1
      %p28 = scmp.ne.s32.totalorder %s23, %s25
      %p29 = scmp.eq.s32.totalorder %s15, 0
      %p30 = por %p28, %p29
      %p31 = scmp.ne.s32.totalorder %s23, %s25
      %p32 = scmp.eq.s32.totalorder %s20, 1
      %p33 = por %p31, %p32
      %p34 = scmp.ne.s32.totalorder %s25, %s26
      %p35 = scmp.eq.s32.totalorder %s20, 0
      %p36 = por %p34, %p35
      %p37 = scmp.ne.s32.totalorder %s25, %s26
      %p38 = scmp.eq.s32.totalorder %s21, 1
      %p39 = por %p37, %p38
      %p41 = scmp.ne.s32.totalorder %s26, %s40
      %p42 = scmp.eq.s32.totalorder %s21, 0
      %p43 = por %p41, %p42
      %s44 = ssub.s32 %s15, %s22
      %p45 = scmp.eq.s32.totalorder %s44, 0
      %s47 = sadd.s32 %s46, 1
      %s48 = scalar_select %p45, %s46, %s47
      %p51 = pneg %p45
      %p52 = scmp.eq.s32.totalorder %s15, 1
      %p53 = por %p51, %p52
      %p54 = scmp.ne.s32.totalorder %s46, %s49
      %p55 = scmp.eq.s32.totalorder %s15, 0
      %p56 = por %p54, %p55
      %p57 = scmp.ne.s32.totalorder %s46, %s49
      %p58 = scmp.eq.s32.totalorder %s20, 1
      %p59 = por %p57, %p58
      %p60 = scmp.ne.s32.totalorder %s49, %s50
      %p61 = scmp.eq.s32.totalorder %s20, 0
      %p62 = por %p60, %p61
      %p63 = scmp.ne.s32.totalorder %s49, %s50
      %p64 = scmp.eq.s32.totalorder %s21, 1
      %p65 = por %p63, %p64
      %p67 = scmp.ne.s32.totalorder %s50, %s66
      %p68 = scmp.eq.s32.totalorder %s21, 0
      %p69 = por %p67, %p68
      %s70 = ssub.s32 %s15, %s22
      %p71 = scmp.eq.s32.totalorder %s70, 0
      %s73 = sadd.s32 %s72, 1
      %s74 = scalar_select %p71, %s72, %s73
      %p77 = pneg %p71
      %p78 = scmp.eq.s32.totalorder %s15, 1
      %p79 = por %p77, %p78
      %p80 = scmp.ne.s32.totalorder %s72, %s75
      %p81 = scmp.eq.s32.totalorder %s15, 0
      %p82 = por %p80, %p81
      %p83 = scmp.ne.s32.totalorder %s72, %s75
      %p84 = scmp.eq.s32.totalorder %s20, 1
      %p85 = por %p83, %p84
      %p86 = scmp.ne.s32.totalorder %s75, %s76
      %p87 = scmp.eq.s32.totalorder %s20, 0
      %p88 = por %p86, %p87
      %p89 = scmp.ne.s32.totalorder %s75, %s76
      %p90 = scmp.eq.s32.totalorder %s21, 1
      %p91 = por %p89, %p90
      %p93 = scmp.ne.s32.totalorder %s76, %s92
      %p94 = scmp.eq.s32.totalorder %s21, 0
      %p95 = por %p93, %p94
      %p96 = scmp.le.s32.totalorder 1, %s15
      %p97 = scmp.lt.s32.totalorder %s15, 3
      %p98 = pnand %p96, %p97
      %p99 = pneg %p98
      // Predicated region
      $region9: #{tpu_custom_call.1} parent=5 // pred_check
        _
      $region10: #{tpu_custom_call.1} parent=5 // pred_check_branch
        %101 = sbr.rel (%p98) target = $region12
      $region11: #{tpu_custom_call.1} parent=5 // pred_region
        %s102 = ssub.s32 %s15, 1
        // Predicated region
        $region13: #{tpu_custom_call.1} parent=11 // pred_check
          %p103 = pneg %p36
        $region14: #{tpu_custom_call.1} parent=11 // pred_check_branch
          %105 = sbr.rel (%p103) target = $region16
        $region15: #{tpu_custom_call.1} parent=11 // pred_region
          _
        $region16: #{tpu_custom_call.1} parent=11 // pred_fallthru
          _
      $region12: #{tpu_custom_call.1} parent=5 // pred_fallthru
        _
      %p106 = scmp.lt.s32.totalorder %s15, 2
      // Predicated region
      $region17: #{tpu_custom_call.1} parent=5 // pred_check
        %p107 = pneg %p106
      $region18: #{tpu_custom_call.1} parent=5 // pred_check_branch
        %109 = sbr.rel (%p107) target = $region20
      $region19: #{tpu_custom_call.1} parent=5 // pred_region
        // Predicated region
        $region21: #{tpu_custom_call.1} parent=19 // pred_check
          %p110 = pneg %p56
        $region22: #{tpu_custom_call.1} parent=19 // pred_check_branch
          %112 = sbr.rel (%p110) target = $region24
        $region23: #{tpu_custom_call.1} parent=19 // pred_region
          %s113 = sand.u32 %s46, 1
          %s114 = scalar_lea.sflag [#allocation4], %s113
          %s115 = sand.u32 %s46, 1
          %s116 = smul.addr %s115, 16
          %s117 = scalar_lea.vmem [#allocation3], %s116
          %s119 = ssub.s32 256, 256
          %120 = vsyncadd %s114, %s119
          %s121 = smul.addr %s15, 2
          %s122 = smul.addr %s121, 128
          %s123 = scalar_lea.hbm %s1, %s122
          %s125 = sshll.u32 %s117, 4
          %s126 = int_to_ptr.vmem [resolvable:$true] %s125
          %128 = dma.hbm_to_vmem [thread:$0]  %s123, 256, %s126, %s114
        $region24: #{tpu_custom_call.1} parent=19 // pred_fallthru
          _
      $region20: #{tpu_custom_call.1} parent=5 // pred_fallthru
        _
      %p129 = scmp.le.s32.totalorder 1, %s15
      %p130 = scmp.lt.s32.totalorder %s15, 3
      %p131 = pnand %p129, %p130
      %p132 = pneg %p131
      // Predicated region
      $region25: #{tpu_custom_call.1} parent=5 // pred_check
        _
      $region26: #{tpu_custom_call.1} parent=5 // pred_check_branch
        %134 = sbr.rel (%p131) target = $region28
      $region27: #{tpu_custom_call.1} parent=5 // pred_region
        %s135 = ssub.s32 %s15, 1
        %s136 = sand.u32 %s49, 1
        %s137 = scalar_lea.sflag [#allocation4], %s136
        %s138 = sand.u32 %s49, 1
        %s139 = smul.addr %s138, 16
        %s140 = scalar_lea.vmem [#allocation3], %s139
        // Predicated region
        $region29: #{tpu_custom_call.1} parent=27 // pred_check
          %p141 = pneg %p62
        $region30: #{tpu_custom_call.1} parent=27 // pred_check_branch
          %143 = sbr.rel (%p141) target = $region32
        $region31: #{tpu_custom_call.1} parent=27 // pred_region
          %144 = dma.done %s137, 256
        $region32: #{tpu_custom_call.1} parent=27 // pred_fallthru
          _
        %p145 = pneg %p36
        %p146 = pneg %p33
        %s147 = sand.u32 %s49, 1
        %s148 = scalar_lea.sflag [#allocation4], %s147
        %s149 = sand.u32 %s49, 1
        %s150 = smul.addr %s149, 16
        %s151 = scalar_lea.vmem [#allocation3], %s150
        %p152 = pneg %p62
        %p153 = pneg %p59
        %p154 = pneg %p88
        %p155 = pneg %p85
        %s156 = sand.u32 %s75, 1
        %s157 = scalar_lea.sflag [#allocation5], %s156
        %s158 = sand.u32 %s75, 1
        %s159 = smul.addr %s158, 16
        %s160 = scalar_lea.vmem [#allocation6], %s159
        %v161 = vld [vmem:[%s140] sm:$0xff]
        %v162 = vld [vmem:[%s140 + $0x8] sm:$0xff]
        %s163 = sld [smem:[#allocation2]]
        %v164 = vstv %s163
        %v165 = vmul.f32 %v161, %v164
        %v166 = vmul.f32 %v162, %v164
        %167 = vst [vmem:[%s160] sm:$0xff] %v165
        %168 = vst [vmem:[%s160 + $0x8] sm:$0xff] %v166
        %s169 = sand.u32 %s75, 1
        %s170 = scalar_lea.sflag [#allocation5], %s169
        %s171 = sand.u32 %s75, 1
        %s172 = smul.addr %s171, 16
        %s173 = scalar_lea.vmem [#allocation6], %s172
        // Predicated region
        $region33: #{tpu_custom_call.1} parent=27 // pred_check
          %p174 = pneg %p85
        $region34: #{tpu_custom_call.1} parent=27 // pred_check_branch
          %176 = sbr.rel (%p174) target = $region36
        $region35: #{tpu_custom_call.1} parent=27 // pred_region
          %s178 = ssub.s32 256, 256
          %179 = vsyncadd %s170, %s178
          %s180 = smul.addr %s20, 2
          %s181 = smul.addr %s180, 128
          %s182 = scalar_lea.hbm %s2, %s181
          %s184 = sshll.u32 %s173, 4
          %s185 = int_to_ptr.vmem [resolvable:$true] %s184
          %187 = dma.vmem_to_hbm [thread:$0]  %s185, 256, %s182, %s170
        $region36: #{tpu_custom_call.1} parent=27 // pred_fallthru
          _
      $region28: #{tpu_custom_call.1} parent=5 // pred_fallthru
        _
      %p188 = scmp.le.s32.totalorder 2, %s15
      // Predicated region
      $region37: #{tpu_custom_call.1} parent=5 // pred_check
        %p189 = pneg %p188
      $region38: #{tpu_custom_call.1} parent=5 // pred_check_branch
        %191 = sbr.rel (%p189) target = $region40
      $region39: #{tpu_custom_call.1} parent=5 // pred_region
        %s192 = ssub.s32 %s15, 2
        // Predicated region
        $region41: #{tpu_custom_call.1} parent=39 // pred_check
          %p193 = pneg %p91
        $region42: #{tpu_custom_call.1} parent=39 // pred_check_branch
          %195 = sbr.rel (%p193) target = $region44
        $region43: #{tpu_custom_call.1} parent=39 // pred_region
          %s196 = sand.u32 %s76, 1
          %s197 = scalar_lea.sflag [#allocation5], %s196
          %s198 = sand.u32 %s76, 1
          %s199 = smul.addr %s198, 16
          %s200 = scalar_lea.vmem [#allocation6], %s199
          %201 = dma.done %s197, 256
        $region44: #{tpu_custom_call.1} parent=39 // pred_fallthru
          _
      $region40: #{tpu_custom_call.1} parent=5 // pred_fallthru
        _
    $region6: #{tpu_custom_call.1} parent=1 // loop_footer
      %s19 = sadd.s32 1, %s15
    $region7: #{tpu_custom_call.1} parent=1 // loop_footer_branch
      %14 = sbr.rel target = $region3
    $region8: #{tpu_custom_call.1} parent=1 // loop_exit
      _
    %202 = vsyncpa [#allocation4], 1
    %s203 = scalar_lea.sflag [#allocation4], 1
    %204 = vsyncpa %s203, 1
    %205 = vsyncpa [#allocation5], 1
    %s206 = scalar_lea.sflag [#allocation5], 1
    %207 = vsyncpa %s206, 1

</llo_original>
